<compile_context>
chip_gen: v7x
topology: tpu7x:2x2x1
jax: 0.10.0
libtpu: 0.0.40
codegen_flags: <defaults>
</compile_context>

<pallas_src>
import jax
import jax.numpy as jnp
from jax.experimental import pallas as pl
from jax.experimental.pallas import tpu as pltpu

_LANE = 128


def _round_up(x, m):
    return ((x + m - 1) // m) * m


def _cdiv(a, b):
    return -(-a // b)


def _chip_info():
    """Returns (vmem_budget_bytes, vmem_limit_cap_bytes, multi_tensorcore)."""
    try:
        kind = jax.devices()[0].device_kind.lower()
    except Exception:
        kind = ""
    multi_tc = ("v7" in kind) or ("7x" in kind)

    vmem_cap = None
    try:
        vmem_cap = int(getattr(pltpu.get_tpu_info(), "vmem_capacity_bytes", 0)) or None
    except Exception:
        vmem_cap = None
    if vmem_cap is None:
        # v5e / v6e have 128 MiB physical VMEM; be conservative otherwise.
        vmem_cap = (128 << 20) if ("v5" in kind or "v6" in kind) else (64 << 20)
    if multi_tc:
        # v7x: 64 MiB per TensorCore regardless of what the chip-level query says.
        vmem_cap = min(vmem_cap, 64 << 20)

    # Budget used for tile sizing (headroom below physical for compiler scratch).
    budget = max(16 << 20, min(vmem_cap - (16 << 20), int(vmem_cap * 0.75)))
    # Hard cap for the scoped vmem_limit_bytes we request.
    limit_cap = max(24 << 20, vmem_cap - (8 << 20))
    return budget, limit_cap, multi_tc


def _cond_linear_kernel(x_ref, t_ref, w_ref, b_ref, e_ref, o_ref):
    # Linear: (tile_b, num_in) @ (num_in, tile_n) on the MXU, f32 accumulation.
    acc = jnp.dot(x_ref[...], w_ref[...], preferred_element_type=jnp.float32)
    acc = acc + b_ref[...]                                    # broadcast (1, tile_n)

    # Embedding lookup in-kernel: one_hot(t) @ embed rides the idle MXU.
    t_col = t_ref[...]                                        # (tile_b, 1) int32
    n_steps = e_ref.shape[0]
    steps = jax.lax.broadcasted_iota(jnp.int32, (t_col.shape[0], n_steps), 1)
    one_hot = (t_col == steps).astype(jnp.float32)            # (tile_b, n_steps)
    gamma = jnp.dot(one_hot, e_ref[...], preferred_element_type=jnp.float32)

    o_ref[...] = (acc * gamma).astype(o_ref.dtype)


def conditional_linear(x, t, w_t, b, embed_w, *, tile_b=2048, tile_n=None,
                       compute_dtype=None, out_dtype=None):
    """ConditionalLinear forward.

    x: (B, num_in) f32, t: (B,) int, w_t: (num_in, num_out) [= Linear.weight.T],
    b: (num_out,), embed_w: (n_steps, num_out).
    compute_dtype: optionally jnp.bfloat16 for x/W (f32 accumulation).
    out_dtype: output dtype (default: x.dtype).
    """
    B, num_in = x.shape
    num_in_w, num_out = w_t.shape
    assert num_in_w == num_in and b.shape == (num_out,) and embed_w.shape[1] == num_out
    n_steps = embed_w.shape[0]
    out_dtype = x.dtype if out_dtype is None else out_dtype

    x_dtype = compute_dtype if compute_dtype is not None else x.dtype
    isz = lambda dt: jnp.dtype(dt).itemsize
    # bf16 packs (16, 128) per vreg tile -> 16-row alignment for 2-byte inputs.
    sub_align = 16 if isz(x_dtype) == 2 else 8

    budget, limit_cap, multi_tc = _chip_info()

    # ---- output-column tiling: keep W / bias / embed blocks bounded ---------
    n_pad128 = _round_up(num_out, _LANE)

    def resident_bytes(tn):
        # Conservative: constant-index blocks counted as double-buffered.
        w_blk = _round_up(num_in, sub_align) * tn * isz(x_dtype)
        b_blk = 8 * tn * 4
        e_blk = _round_up(n_steps, 8) * tn * 4
        return 2 * (w_blk + b_blk + e_blk)

    if tile_n is None:
        cands = [c for c in (n_pad128, 2048, 1024, 512, 256, 128) if c <= n_pad128]
        tile_n = cands[-1]
        for cand in cands:
            if resident_bytes(cand) <= budget // 2:
                tile_n = cand
                break
    assert tile_n % _LANE == 0
    N_pad = _round_up(num_out, tile_n)

    # ---- batch tile: as big as the VMEM budget allows ------------------------
    # Per-row streamed bytes, double-buffered, with lane padding accounted for:
    #   x lane-pads num_in -> 128 multiple; t column lane-pads 1 -> 128 lanes.
    row_bytes = 2 * (_round_up(num_in, _LANE) * isz(x_dtype)
                     + _LANE * 4
                     + tile_n * isz(out_dtype))
    res = resident_bytes(tile_n)
    cap_rows = max(sub_align, (budget - res) // row_bytes)

    tb = min(tile_b, cap_rows, _round_up(B, sub_align))
    tb = max(sub_align, (tb // sub_align) * sub_align)
    if multi_tc and B >= 2 * sub_align:
        # v7x: keep >= 2 batch blocks so both TensorCores get work.
        tb = min(tb, _round_up(_cdiv(B, 2), sub_align))
    tile_b = tb
    B_pad = _round_up(B, tile_b)
    n_i, n_j = B_pad // tile_b, N_pad // tile_n

    # ---- dtype / padding glue (cheap, not the hot path) ----------------------
    if compute_dtype is not None:
        x = x.astype(compute_dtype)
        w_t = w_t.astype(compute_dtype)
    if B_pad != B:
        x = jnp.pad(x, ((0, B_pad - B), (0, 0)))
        t = jnp.pad(t, (0, B_pad - B))                 # padded rows -> t=0, sliced off
    t2 = t.astype(jnp.int32).reshape(B_pad, 1)
    b2 = b.astype(jnp.float32).reshape(1, num_out)
    e2 = embed_w.astype(jnp.float32)
    if N_pad != num_out:
        w_t = jnp.pad(w_t, ((0, 0), (0, N_pad - num_out)))
        b2 = jnp.pad(b2, ((0, 0), (0, N_pad - num_out)))
        e2 = jnp.pad(e2, ((0, 0), (0, N_pad - num_out)))

    # ---- explicit, generation-aware VMEM budget ------------------------------
    est = res + row_bytes * tile_b
    vmem_limit = int(min(limit_cap, max(est * 5 // 4, 16 << 20)))

    out = pl.pallas_call(
        _cond_linear_kernel,
        out_shape=jax.ShapeDtypeStruct((B_pad, N_pad), out_dtype),
        grid_spec=pltpu.PrefetchScalarGridSpec(
            num_scalar_prefetch=0,
            grid=(n_i, n_j),
            in_specs=[
                pl.BlockSpec((tile_b, num_in), lambda i, j: (i, 0)),   # x tile
                pl.BlockSpec((tile_b, 1), lambda i, j: (i, 0)),        # t column tile
                pl.BlockSpec((num_in, tile_n), lambda i, j: (0, j)),   # W block
                pl.BlockSpec((1, tile_n), lambda i, j: (0, j)),        # bias block
                pl.BlockSpec((n_steps, tile_n), lambda i, j: (0, j)),  # embed block
            ],
            out_specs=pl.BlockSpec((tile_b, tile_n), lambda i, j: (i, j)),
        ),
        compiler_params=pltpu.CompilerParams(
            dimension_semantics=("parallel", "parallel"),
            vmem_limit_bytes=vmem_limit),
    )(x, t2, w_t, b2, e2)

    if B_pad != B or N_pad != num_out:
        out = out[:B, :num_out]
    return out


if __name__ == "__main__":
    # Small shapes consistent with the module.
    B, num_in, num_out, n_steps = 8, 32, 128, 10

    key = jax.random.PRNGKey(0)
    kx, kt, kw, kb, ke = jax.random.split(key, 5)

    # Deterministic "parameters" (mimic PyTorch default inits).
    bound = 1.0 / jnp.sqrt(jnp.float32(num_in))
    w = jax.random.uniform(kw, (num_out, num_in), jnp.float32, -bound, bound)   # Linear.weight
    b = jax.random.uniform(kb, (num_out,), jnp.float32, -bound, bound)          # Linear.bias
    embed_w = jax.random.uniform(ke, (n_steps, num_out), jnp.float32, 0.0, 1.0) # Embedding.uniform_()

    def ref_fn(x_, t_):
        return (x_ @ w.T + b) * jnp.take(embed_w, t_, axis=0)

    # 1) Small f32 run (strict check).
    x = jax.random.normal(kx, (B, num_in), jnp.float32)
    t = jax.random.randint(kt, (B,), 0, n_steps, jnp.int32)
    out = jax.block_until_ready(conditional_linear(x, t, w.T, b, embed_w))
    assert out.shape == (B, num_out)
    assert jnp.allclose(out, ref_fn(x, t), atol=1e-5, rtol=1e-5)

    # 2) Ragged batch (single maximal tile on 1-TC chips, 2 blocks on v7x).
    B2 = 300
    kx2, kt2 = jax.random.split(jax.random.PRNGKey(1))
    x2 = jax.random.normal(kx2, (B2, num_in), jnp.float32)
    t2 = jax.random.randint(kt2, (B2,), 0, n_steps, jnp.int32)
    out2 = jax.block_until_ready(conditional_linear(x2, t2, w.T, b, embed_w))
    assert out2.shape == (B2, num_out)
    assert jnp.allclose(out2, ref_fn(x2, t2), atol=1e-5, rtol=1e-5)

    # 3) bf16 compute + bf16 output (16-row aligned tiles; looser tolerance).
    out3 = jax.block_until_ready(
        conditional_linear(x2, t2, w.T, b, embed_w,
                           compute_dtype=jnp.bfloat16, out_dtype=jnp.bfloat16))
    assert out3.dtype == jnp.bfloat16
    assert jnp.allclose(out3.astype(jnp.float32), ref_fn(x2, t2), atol=5e-2, rtol=5e-2)

    # 4) Larger batch: exercises the multi-block batch grid and big-tile path.
    B3 = 5000
    kx3, kt3 = jax.random.split(jax.random.PRNGKey(2))
    x3 = jax.random.normal(kx3, (B3, num_in), jnp.float32)
    t3 = jax.random.randint(kt3, (B3,), 0, n_steps, jnp.int32)
    out4 = jax.block_until_ready(conditional_linear(x3, t3, w.T, b, embed_w))
    assert out4.shape == (B3, num_out)
    assert jnp.allclose(out4, ref_fn(x3, t3), atol=1e-5, rtol=1e-5)

    print("KERNEL_OK")
</pallas_src>

<mosaic_0001>
module attributes {stable_mosaic.version = 11 : i64} {
  func.func @_cond_linear_kernel(%arg0: i32, %arg1: i32, %arg2: memref<8x32xf32, #tpu.memory_space<vmem>>, %arg3: memref<8x1xi32, #tpu.memory_space<vmem>>, %arg4: memref<32x128xf32, #tpu.memory_space<vmem>>, %arg5: memref<1x128xf32, #tpu.memory_space<vmem>>, %arg6: memref<10x128xf32, #tpu.memory_space<vmem>>, %arg7: memref<8x128xf32, #tpu.memory_space<vmem>>) attributes {dimension_semantics = [#tpu.dimension_semantics<parallel>, #tpu.dimension_semantics<parallel>], iteration_bounds = array<i64: 1, 1>, scalar_prefetch = 0 : i64, scratch_operands = 0 : i64, tpu.core_type = #tpu.core_type<tc>, window_params = [{transform_indices = @transform_0, window_bounds = array<i64: 8, 32>}, {transform_indices = @transform_1, window_bounds = array<i64: 8, 1>}, {transform_indices = @transform_2, window_bounds = array<i64: 32, 128>}, {transform_indices = @transform_3, window_bounds = array<i64: 1, 128>}, {transform_indices = @transform_4, window_bounds = array<i64: 10, 128>}, {transform_indices = @transform_5, window_bounds = array<i64: 8, 128>}]} {
    %c0 = arith.constant 0 : index
    %c0_0 = arith.constant 0 : index
    %0 = vector.load %arg2[%c0, %c0_0] : memref<8x32xf32, #tpu.memory_space<vmem>>, vector<8x32xf32>
    %c0_1 = arith.constant 0 : index
    %c0_2 = arith.constant 0 : index
    %1 = vector.load %arg4[%c0_1, %c0_2] : memref<32x128xf32, #tpu.memory_space<vmem>>, vector<32x128xf32>
    %cst = arith.constant dense<0.000000e+00> : vector<8x128xf32>
    %2 = tpu.matmul %0, %1, %cst {dimension_numbers = #tpu.dot_dimension_numbers<[1], [0], [0], [1], [0, 0, 1, 1], [], []>} : vector<8x32xf32>, vector<32x128xf32>, vector<8x128xf32> -> vector<8x128xf32>
    %c0_3 = arith.constant 0 : index
    %c0_4 = arith.constant 0 : index
    %3 = vector.load %arg5[%c0_3, %c0_4] : memref<1x128xf32, #tpu.memory_space<vmem>>, vector<1x128xf32>
    %4 = vector.broadcast %3 : vector<1x128xf32> to vector<8x128xf32>
    %5 = arith.addf %2, %4 : vector<8x128xf32>
    %c0_5 = arith.constant 0 : index
    %c0_6 = arith.constant 0 : index
    %6 = vector.load %arg3[%c0_5, %c0_6] : memref<8x1xi32, #tpu.memory_space<vmem>>, vector<8x1xi32>
    %7 = tpu.iota {dimensions = array<i32: 1>} : vector<8x10xi32>
    %8 = vector.broadcast %6 : vector<8x1xi32> to vector<8x10xi32>
    %9 = arith.cmpi eq, %8, %7 : vector<8x10xi32>
    %10 = arith.extui %9 : vector<8x10xi1> to vector<8x10xi32>
    %11 = arith.sitofp %10 : vector<8x10xi32> to vector<8x10xf32>
    %c0_7 = arith.constant 0 : index
    %c0_8 = arith.constant 0 : index
    %12 = vector.load %arg6[%c0_7, %c0_8] : memref<10x128xf32, #tpu.memory_space<vmem>>, vector<10x128xf32>
    %cst_9 = arith.constant dense<0.000000e+00> : vector<8x128xf32>
    %13 = tpu.matmul %11, %12, %cst_9 {dimension_numbers = #tpu.dot_dimension_numbers<[1], [0], [0], [1], [0, 0, 1, 1], [], []>} : vector<8x10xf32>, vector<10x128xf32>, vector<8x128xf32> -> vector<8x128xf32>
    %14 = arith.mulf %5, %13 : vector<8x128xf32>
    %c0_10 = arith.constant 0 : index
    %c0_11 = arith.constant 0 : index
    %15 = vector.load %arg7[%c0_10, %c0_11] : memref<8x128xf32, #tpu.memory_space<vmem>>, vector<8x128xf32>
    tpu.vector_store %arg7[%c0_10, %c0_11], %14 {strides = array<i32>} : memref<8x128xf32, #tpu.memory_space<vmem>>, vector<8x128xf32>,
    return
  }
  func.func @transform_0(%arg0: i32, %arg1: i32) -> (i32, i32) {
    %c0_i32 = arith.constant 0 : i32
    %c0_i32_0 = arith.constant 0 : i32
    return %arg0, %c0_i32 : i32, i32
  }
  func.func @transform_1(%arg0: i32, %arg1: i32) -> (i32, i32) {
    %c0_i32 = arith.constant 0 : i32
    %c0_i32_0 = arith.constant 0 : i32
    return %arg0, %c0_i32 : i32, i32
  }
  func.func @transform_2(%arg0: i32, %arg1: i32) -> (i32, i32) {
    %c0_i32 = arith.constant 0 : i32
    %c0_i32_0 = arith.constant 0 : i32
    return %c0_i32, %arg1 : i32, i32
  }
  func.func @transform_3(%arg0: i32, %arg1: i32) -> (i32, i32) {
    %c0_i32 = arith.constant 0 : i32
    %c0_i32_0 = arith.constant 0 : i32
    return %c0_i32, %arg1 : i32, i32
  }
  func.func @transform_4(%arg0: i32, %arg1: i32) -> (i32, i32) {
    %c0_i32 = arith.constant 0 : i32
    %c0_i32_0 = arith.constant 0 : i32
    return %c0_i32, %arg1 : i32, i32
  }
  func.func @transform_5(%arg0: i32, %arg1: i32) -> (i32, i32) {
    %c0_i32 = arith.constant 0 : i32
    return %arg0, %arg1 : i32, i32
  }
}

</mosaic_0001>

<llo_original>
// kernel: tpu_custom_call.1
$region0: #{tpu_custom_call.1}
  #allocation0 [shape = 'u32[]', space=smem, size = 0x4, offset = 0x4, fixed_abs, tag = 'smem constant byte address 0x4 - core index']
  #allocation1 [shape = 'u32[144,128]{1,0:T(1,128)}', space=vmem, size = 0x12000, scoped, tag = 'internal scratch']
  %s0 = inlined_call_operand.vmem [shape: f32[8,32], index: 0, kind: input, shape index: {}]
  %s1 = inlined_call_operand.vmem [shape: s32[8,1], index: 1, kind: input, shape index: {}]
  %s2 = inlined_call_operand.hbm [shape: f32[32,128], index: 2, kind: input, shape index: {}]
  %s3 = inlined_call_operand.hbm [shape: f32[1,128], index: 3, kind: input, shape index: {}]
  %s4 = inlined_call_operand.vmem [shape: f32[10,128], index: 4, kind: input, shape index: {}]
  %s5 = inlined_call_operand.hbm [shape: f32[8,128], index: 5, kind: output, shape index: {}]
  %s6 = sld [smem:[#allocation0]]
  $region38: #{tpu_custom_call.1} parent=0
    _
  %s8 = ssub.s32 1, %s6
  %s9 = scalar_select 0, %s8, %s6
  $region1: #{tpu_custom_call.1} parent=0
    #allocation2 [shape = 'u8[16384]{0}', space=vmem, size = 0x4000, scoped, tag = 'input window, operand 2, single buffered']
    #allocation3 [shape = 's32[1]{0}', space=sflag, size = 0x4, scoped, tag = 'scoped memory for tpu_custom_call.1']
    #allocation4 [shape = 's32[1]{0}', space=sflag, size = 0x4, scoped, tag = 'scoped memory for tpu_custom_call.1']
    #allocation5 [shape = 'u8[512]{0}', space=vmem, size = 0x400, scoped, tag = 'input window, operand 3, single buffered']
    #allocation6 [shape = 's32[1]{0}', space=sflag, size = 0x4, scoped, tag = 'scoped memory for tpu_custom_call.1']
    #allocation7 [shape = 'u8[4096]{0}', space=vmem, size = 0x1000, scoped, tag = 'output window, operand 0, single buffered']
    %10 = vsyncpa [#allocation3], 0
    %11 = vsyncpa [#allocation6], 0
    %12 = vsyncpa [#allocation4], 0
    // Predicated region
    $region2: #{tpu_custom_call.1} parent=1 // pred_check
      _
    $region3: #{tpu_custom_call.1} parent=1 // pred_check_branch
      %14 = sbr.rel (0) target = $region5
    $region4: #{tpu_custom_call.1} parent=1 // pred_region
      _
    $region5: #{tpu_custom_call.1} parent=1 // pred_fallthru
      _
    // Predicated region
    $region6: #{tpu_custom_call.1} parent=1 // pred_check
      _
    $region7: #{tpu_custom_call.1} parent=1 // pred_check_branch
      %16 = sbr.rel (0) target = $region9
    $region8: #{tpu_custom_call.1} parent=1 // pred_region
      _
    $region9: #{tpu_custom_call.1} parent=1 // pred_fallthru
      _
    // Predicated region
    $region10: #{tpu_custom_call.1} parent=1 // pred_check
      _
    $region11: #{tpu_custom_call.1} parent=1 // pred_check_branch
      %18 = sbr.rel (0) target = $region13
    $region12: #{tpu_custom_call.1} parent=1 // pred_region
      %s20 = ssub.s32 512, 512
      %21 = vsyncadd [#allocation3], %s20
      %s22 = sshll.u32 [#allocation2], 4
      %s23 = int_to_ptr.vmem [resolvable:$true] %s22
      %28 = dma.hbm_to_vmem [thread:$0]  %s2, 512, %s23, [#allocation3], 128, 128, 8
    $region13: #{tpu_custom_call.1} parent=1 // pred_fallthru
      _
    // Predicated region
    $region14: #{tpu_custom_call.1} parent=1 // pred_check
      _
    $region15: #{tpu_custom_call.1} parent=1 // pred_check_branch
      %30 = sbr.rel (0) target = $region17
    $region16: #{tpu_custom_call.1} parent=1 // pred_region
      %s32 = ssub.s32 16, 16
      %33 = vsyncadd [#allocation6], %s32
      %s35 = sshll.u32 [#allocation5], 4
      %s36 = int_to_ptr.vmem [resolvable:$true] %s35
      %38 = dma.hbm_to_vmem [thread:$0]  %s3, 16, %s36, [#allocation6]
    $region17: #{tpu_custom_call.1} parent=1 // pred_fallthru
      _
    // Predicated region
    $region18: #{tpu_custom_call.1} parent=1 // pred_check
      _
    $region19: #{tpu_custom_call.1} parent=1 // pred_check_branch
      %40 = sbr.rel (0) target = $region21
    $region20: #{tpu_custom_call.1} parent=1 // pred_region
      _
    $region21: #{tpu_custom_call.1} parent=1 // pred_fallthru
      _
    // Predicated region
    $region22: #{tpu_custom_call.1} parent=1 // pred_check
      _
    $region23: #{tpu_custom_call.1} parent=1 // pred_check_branch
      %42 = sbr.rel (0) target = $region25
    $region24: #{tpu_custom_call.1} parent=1 // pred_region
      %43 = dma.done [#allocation3], 512
    $region25: #{tpu_custom_call.1} parent=1 // pred_fallthru
      _
    // Predicated region
    $region26: #{tpu_custom_call.1} parent=1 // pred_check
      _
    $region27: #{tpu_custom_call.1} parent=1 // pred_check_branch
      %45 = sbr.rel (0) target = $region29
    $region28: #{tpu_custom_call.1} parent=1 // pred_region
      %46 = dma.done [#allocation6], 16
    $region29: #{tpu_custom_call.1} parent=1 // pred_fallthru
      _
    %v47 = vld [vmem:[%s0] sm:$0xff]
    %v48 = vld [vmem:[#allocation2] sm:$0xff]
    %v49 = vld [vmem:[#allocation2 + $0x8] sm:$0xff]
    %v50 = vld [vmem:[#allocation2 + $0x10] sm:$0xff]
    %v51 = vld [vmem:[#allocation2 + $0x18] sm:$0xff]
    %v52 = vld [vmem:[#allocation5] sm:$0x1]
    %v54 = vlaneseq
    %v55 = vshrl.u32 %v54, 7
    %v56 = vsub.s32 0, %v55
    %v57 = vrot.slane %v52, %v56
    %vm59 = vcmask 261120
    %v61 = vsel %vm59, %v47, 0
    %63 = vmatprep.subr.mxu0 0.0
    %64 = vmatpush1.msra.mxu0 %v48
    %65 = vmatprep.subr.mxu0 0.0
    %66 = vmatpush1.msra.mxu0 %v49
    %67 = vmatprep.subr.mxu0 0.0
    %68 = vmatpush1.msra.mxu0 %v50
    %69 = vmatprep.subr.mxu0 0.0
    %70 = vmatpush1.msra.mxu0 %v51
    %71 = vmatprep.subr.mxu0 0.0
    %72 = vmatpush1.msra.mxu0 0.0
    %73 = vmatprep.subr.mxu0 0.0
    %74 = vmatpush1.msra.mxu0 0.0
    %75 = vmatprep.subr.mxu0 0.0
    %76 = vmatpush1.msra.mxu0 0.0
    %77 = vmatprep.subr.mxu0 0.0
    %78 = vmatpush1.msra.mxu0 0.0
    %79 = vmatprep.subr.mxu0 0.0
    %80 = vmatpush1.msra.mxu0 0.0
    %81 = vmatprep.subr.mxu0 0.0
    %82 = vmatpush1.msra.mxu0 0.0
    %83 = vmatprep.subr.mxu0 0.0
    %84 = vmatpush1.msra.mxu0 0.0
    %85 = vmatprep.subr.mxu0 0.0
    %86 = vmatpush1.msra.mxu0 0.0
    %87 = vmatprep.subr.mxu0 0.0
    %88 = vmatpush1.msra.mxu0 0.0
    %89 = vmatprep.subr.mxu0 0.0
    %90 = vmatpush1.msra.mxu0 0.0
    %91 = vmatprep.subr.mxu0 0.0
    %92 = vmatpush1.msra.mxu0 0.0
    %93 = vmatprep.subr.mxu0 0.0
    %94 = vmatpush1.msra.mxu0 0.0
    %95 = vmatprep.subr.mxu0 0.0
    %96 = vmatpush1.msra.mxu0 0.0
    %97 = vmatprep.subr.mxu0 0.0
    %98 = vmatpush1.msra.mxu0 0.0
    %99 = vmatprep.subr.mxu0 0.0
    %100 = vmatpush1.msra.mxu0 0.0
    %101 = vmatprep.subr.mxu0 0.0
    %102 = vmatpush1.msra.mxu0 0.0
    %103 = vmatprep.subr.mxu0 0.0
    %104 = vmatpush1.msra.mxu0 0.0
    %105 = vmatprep.subr.mxu0 0.0
    %106 = vmatpush1.msra.mxu0 0.0
    %107 = vmatprep.subr.mxu0 0.0
    %108 = vmatpush1.msra.mxu0 0.0
    %109 = vmatprep.subr.mxu0 0.0
    %110 = vmatpush1.msra.mxu0 0.0
    %111 = vmatprep.subr.mxu0 0.0
    %112 = vmatpush1.msra.mxu0 0.0
    %113 = vmatprep.subr.mxu0 0.0
    %114 = vmatpush1.msra.mxu0 0.0
    %115 = vmatprep.subr.mxu0 0.0
    %116 = vmatpush1.msra.mxu0 0.0
    %117 = vmatprep.subr.mxu0 0.0
    %118 = vmatpush1.msra.mxu0 0.0
    %119 = vmatprep.subr.mxu0 0.0
    %120 = vmatpush1.msra.mxu0 0.0
    %121 = vmatprep.subr.mxu0 0.0
    %122 = vmatpush1.msra.mxu0 0.0
    %123 = vmatprep.subr.mxu0 0.0
    %124 = vmatpush1.msra.mxu0 0.0
    %125 = vmatprep.subr.mxu0 0.0
    %126 = vmatpush1.msra.mxu0 0.0
    %127 = vmatprep.mubr.f32.mxu0 0.0
    %128 = vmatmul.mubr.f32.gmra.mrb[0].mxu0 %v61
    %v129 = vpop.f32.mrb[0].mxu0
    %v130 = vadd.f32 %v57, %v129
    %v131 = vpop.f32.mrb[0].mxu0
    %132 = vdwg.mxu0
    %v133 = vld [vmem:[%s1] sm:$0xff]
    %v134 = vlaneseq
    %v135 = vand.u32 %v134, 127
    %136 = vset.pattern.permute.xlu0 0
    %137 = vperm.xlu0 %136, %v133
    %v138 = vpop.permute.xlu0 %137
    %vm139 = vcmp.eq.s32.totalorder %v138, %v135
    %v140 = vsel %vm139, 1, 0
    %v141 = vcvt.s32.f32 %v140
    %v142 = vld [vmem:[%s4] sm:$0xff]
    %v143 = vld [vmem:[%s4 + $0x8] sm:$0x3]
    %vm144 = vcmask 80896
    %v146 = vsel %vm144, %v141, 0
    %vm148 = vcmask 1041408
    %v150 = vsel %vm148, %v143, 0
    %152 = vmatprep.subr.mxu0 0.0
    %153 = vmatpush1.msra.mxu0 %v142
    %154 = vmatprep.subr.mxu0 0.0
    %155 = vmatpush1.msra.mxu0 %v150
    %156 = vmatprep.subr.mxu0 0.0
    %157 = vmatpush1.msra.mxu0 0.0
    %158 = vmatprep.subr.mxu0 0.0
    %159 = vmatpush1.msra.mxu0 0.0
    %160 = vmatprep.subr.mxu0 0.0
    %161 = vmatpush1.msra.mxu0 0.0
    %162 = vmatprep.subr.mxu0 0.0
    %163 = vmatpush1.msra.mxu0 0.0
    %164 = vmatprep.subr.mxu0 0.0
    %165 = vmatpush1.msra.mxu0 0.0
    %166 = vmatprep.subr.mxu0 0.0
    %167 = vmatpush1.msra.mxu0 0.0
    %168 = vmatprep.subr.mxu0 0.0
    %169 = vmatpush1.msra.mxu0 0.0
    %170 = vmatprep.subr.mxu0 0.0
    %171 = vmatpush1.msra.mxu0 0.0
    %172 = vmatprep.subr.mxu0 0.0
    %173 = vmatpush1.msra.mxu0 0.0
    %174 = vmatprep.subr.mxu0 0.0
    %175 = vmatpush1.msra.mxu0 0.0
    %176 = vmatprep.subr.mxu0 0.0
    %177 = vmatpush1.msra.mxu0 0.0
    %178 = vmatprep.subr.mxu0 0.0
    %179 = vmatpush1.msra.mxu0 0.0
    %180 = vmatprep.subr.mxu0 0.0
    %181 = vmatpush1.msra.mxu0 0.0
    %182 = vmatprep.subr.mxu0 0.0
    %183 = vmatpush1.msra.mxu0 0.0
    %184 = vmatprep.subr.mxu0 0.0
    %185 = vmatpush1.msra.mxu0 0.0
    %186 = vmatprep.subr.mxu0 0.0
    %187 = vmatpush1.msra.mxu0 0.0
    %188 = vmatprep.subr.mxu0 0.0
    %189 = vmatpush1.msra.mxu0 0.0
    %190 = vmatprep.subr.mxu0 0.0
    %191 = vmatpush1.msra.mxu0 0.0
    %192 = vmatprep.subr.mxu0 0.0
    %193 = vmatpush1.msra.mxu0 0.0
    %194 = vmatprep.subr.mxu0 0.0
    %195 = vmatpush1.msra.mxu0 0.0
    %196 = vmatprep.subr.mxu0 0.0
    %197 = vmatpush1.msra.mxu0 0.0
    %198 = vmatprep.subr.mxu0 0.0
    %199 = vmatpush1.msra.mxu0 0.0
    %200 = vmatprep.subr.mxu0 0.0
    %201 = vmatpush1.msra.mxu0 0.0
    %202 = vmatprep.subr.mxu0 0.0
    %203 = vmatpush1.msra.mxu0 0.0
    %204 = vmatprep.subr.mxu0 0.0
    %205 = vmatpush1.msra.mxu0 0.0
    %206 = vmatprep.subr.mxu0 0.0
    %207 = vmatpush1.msra.mxu0 0.0
    %208 = vmatprep.subr.mxu0 0.0
    %209 = vmatpush1.msra.mxu0 0.0
    %210 = vmatprep.subr.mxu0 0.0
    %211 = vmatpush1.msra.mxu0 0.0
    %212 = vmatprep.subr.mxu0 0.0
    %213 = vmatpush1.msra.mxu0 0.0
    %214 = vmatprep.subr.mxu0 0.0
    %215 = vmatpush1.msra.mxu0 0.0
    %216 = vmatprep.mubr.f32.mxu0 0.0
    %217 = vmatmul.mubr.f32.gmra.mrb[0].mxu0 %v146
    %v218 = vpop.f32.mrb[0].mxu0
    %v219 = vadd.f32 0.0, %v218
    %v220 = vpop.f32.mrb[0].mxu0
    %221 = vdwg.mxu0
    %v222 = vmul.f32 %v130, %v219
    %223 = vst [vmem:[#allocation7] sm:$0xff] %v222
    // Predicated region
    $region30: #{tpu_custom_call.1} parent=1 // pred_check
      _
    $region31: #{tpu_custom_call.1} parent=1 // pred_check_branch
      %225 = sbr.rel (0) target = $region33
    $region32: #{tpu_custom_call.1} parent=1 // pred_region
      %s227 = ssub.s32 128, 128
      %228 = vsyncadd [#allocation4], %s227
      %s230 = sshll.u32 [#allocation7], 4
      %s231 = int_to_ptr.vmem [resolvable:$true] %s230
      %233 = dma.vmem_to_hbm [thread:$0]  %s231, 128, %s5, [#allocation4]
    $region33: #{tpu_custom_call.1} parent=1 // pred_fallthru
      _
    // Predicated region
    $region34: #{tpu_custom_call.1} parent=1 // pred_check
      _
    $region35: #{tpu_custom_call.1} parent=1 // pred_check_branch
      %235 = sbr.rel (0) target = $region37
    $region36: #{tpu_custom_call.1} parent=1 // pred_region
      %236 = dma.done [#allocation4], 128
    $region37: #{tpu_custom_call.1} parent=1 // pred_fallthru
      _
    %237 = vsyncpa [#allocation3], 1
    %238 = vsyncpa [#allocation6], 1
    %239 = vsyncpa [#allocation4], 1

</llo_original>
